<compile_context>
chip_gen: v5e
topology: v5e:2x2
jax: 0.10.0
libtpu: 0.0.40
codegen_flags: <defaults>
</compile_context>

<pallas_src>
import functools

import jax
import jax.numpy as jnp
from jax.experimental import pallas as pl
from jax.experimental.pallas import tpu as pltpu


MXU_DTYPE = jnp.bfloat16  # matmul operand dtype (f32 accumulation everywhere)


def emitter_kernel(zT_ref, w1_ref, b1_ref, w2_ref, b2_ref, w3_ref, b3_ref,
                   stdT_ref, epsT_ref, out_ref):
    """One lane-tile (feature-major) of the fused Emitter forward.

    zT_ref  : [z_dim, TR]  bf16, per-tile (rows of the batch live in the lane dim)
    w*_ref  : bf16 weights in nn.Linear [out, in] layout, resident across the grid
    b*_ref  : [out, 1] f32 biases, resident (lane-broadcast)
    stdT_ref: [D, 1]   f32 = exp(0.5*logvar), resident
    epsT_ref: [D, TR]  f32 noise, per-tile
    out_ref : [2*D, TR] f32 merged slab: rows [0:D) = x_t, rows [D:2D) = mu
    """
    D = stdT_ref.shape[0]

    # h1 = relu(W1 @ z^T + b1)            (bf16 MXU, f32 accumulate / elementwise)
    h1 = jnp.dot(w1_ref[...], zT_ref[...],
                 preferred_element_type=jnp.float32) + b1_ref[...]
    h1 = jnp.maximum(h1, 0.0)

    # h2 = relu(W2 @ h1 + b2)
    h2 = jnp.dot(w2_ref[...], h1.astype(w2_ref.dtype),
                 preferred_element_type=jnp.float32) + b2_ref[...]
    h2 = jnp.maximum(h2, 0.0)

    # mu = W3 @ h2 + b3
    mu = jnp.dot(w3_ref[...], h2.astype(w3_ref.dtype),
                 preferred_element_type=jnp.float32) + b3_ref[...]

    # reparameterization: x = mu + eps * std   (std precomputed -> no per-tile exp)
    x = mu + epsT_ref[...] * stdT_ref[...]

    # single lane-dense store of the merged slab (sublane concat at multiple-of-8
    # boundary D=16, so this is one unmasked store per tile)
    out_ref[...] = jnp.concatenate([x, mu], axis=0).astype(out_ref.dtype)


def _round_up(x, m):
    return ((x + m - 1) // m) * m


def emitter_forward(z, params, eps, *, tile_r=2048):
    """Pallas-backed batched Emitter.forward (feature-major layout).

    z   : [..., z_dim]      (any number of leading dims, e.g. [T, B, z_dim])
    eps : [..., input_dim]  standard-normal noise (stand-in for torch.randn)
    Returns (x_t, mu, logvar) with x_t, mu shaped [..., input_dim].
    """
    w1, b1, w2, b2, w3, b3, logvar = params   # weights in nn.Linear [out, in] layout
    hid_dim, z_dim = w1.shape
    D = w3.shape[0]

    lead = z.shape[:-1]
    # Row axis -> lane (last) dimension.  Wrapper transposes are layout plumbing.
    zT = z.reshape(-1, z_dim).T.astype(MXU_DTYPE)      # [z_dim, R] bf16
    epsT = eps.reshape(-1, D).T.astype(jnp.float32)    # [D, R]     f32
    R = zT.shape[1]

    # Lane tile: multiple of 128, large enough to cover R in one / a few grid steps,
    # capped by tile_r.  VMEM/tile ~ (2*z_dim + 4*D + 8*D) bytes per column, x2 bufs
    # -> ~0.5 MiB at tile_r=2048 with these feature dims: fits every TPU generation.
    tile = max(128, min(_round_up(R, 128), _round_up(tile_r, 128)))
    n_tiles = pl.cdiv(R, tile)   # ragged last block handled by Pallas, no jnp.pad

    w1_mx = w1.astype(MXU_DTYPE)
    w2_mx = w2.astype(MXU_DTYPE)
    w3_mx = w3.astype(MXU_DTYPE)
    b1_c = b1.reshape(hid_dim, 1).astype(jnp.float32)
    b2_c = b2.reshape(hid_dim, 1).astype(jnp.float32)
    b3_c = b3.reshape(D, 1).astype(jnp.float32)
    std_c = jnp.exp(0.5 * logvar).reshape(D, 1).astype(jnp.float32)

    # Parameters: constant index_map -> loaded once, resident across the grid.
    # (pl.Buffered(1) on these would drop the unused second buffer, but the saving
    #  is negligible at hid_dim=32, so we keep the default for maximal portability.)
    resident = lambda arr: pl.BlockSpec(arr.shape, lambda i: (0, 0))

    out = pl.pallas_call(
        emitter_kernel,
        out_shape=jax.ShapeDtypeStruct((2 * D, R), jnp.float32),
        grid_spec=pltpu.PrefetchScalarGridSpec(
            num_scalar_prefetch=0,
            grid=(n_tiles,),
            in_specs=[
                pl.BlockSpec((z_dim, tile), lambda i: (0, i)),   # z^T   (per-tile)
                resident(w1_mx), resident(b1_c),                 # layer 1 params
                resident(w2_mx), resident(b2_c),                 # layer 2 params
                resident(w3_mx), resident(b3_c),                 # layer 3 params
                resident(std_c),                                 # std = exp(0.5*logvar)
                pl.BlockSpec((D, tile), lambda i: (0, i)),       # eps^T (per-tile)
            ],
            out_specs=pl.BlockSpec((2 * D, tile), lambda i: (0, i)),
        ),
        compiler_params=pltpu.CompilerParams(
            dimension_semantics=("parallel",),   # independent row tiles
        ),
    )(zT, w1_mx, b1_c, w2_mx, b2_c, w3_mx, b3_c, std_c, epsT)

    x_t = out[:D, :].T.reshape(*lead, D)
    mu = out[D:, :].T.reshape(*lead, D)
    return x_t, mu, logvar


def init_params(key, z_dim, hid_dim, input_dim):
    """Deterministic parameter init (shapes from Emitter.__init__, [out, in] layout)."""
    k1, k2, k3, k4, k5, k6 = jax.random.split(key, 6)
    w1 = jax.random.normal(k1, (hid_dim, z_dim), jnp.float32) * 0.1
    b1 = jax.random.normal(k2, (hid_dim,), jnp.float32) * 0.1
    w2 = jax.random.normal(k3, (hid_dim, hid_dim), jnp.float32) * 0.1
    b2 = jax.random.normal(k4, (hid_dim,), jnp.float32) * 0.1
    w3 = jax.random.normal(k5, (input_dim, hid_dim), jnp.float32) * 0.1
    b3 = jax.random.normal(k6, (input_dim,), jnp.float32) * 0.1
    logvar = jnp.ones((input_dim,), jnp.float32)  # nn.Parameter(torch.ones(input_dim))
    return (w1, b1, w2, b2, w3, b3, logvar)


def reference_forward(z, params, eps):
    """Plain-JAX reference with the same bf16-operand / f32-accumulate matmuls."""
    w1, b1, w2, b2, w3, b3, logvar = params
    f32 = jnp.float32
    h1 = jax.nn.relu(
        jnp.dot(z.astype(MXU_DTYPE), w1.T.astype(MXU_DTYPE),
                preferred_element_type=f32) + b1)
    h2 = jax.nn.relu(
        jnp.dot(h1.astype(MXU_DTYPE), w2.T.astype(MXU_DTYPE),
                preferred_element_type=f32) + b2)
    mu = jnp.dot(h2.astype(MXU_DTYPE), w3.T.astype(MXU_DTYPE),
                 preferred_element_type=f32) + b3
    x_t = mu + eps * jnp.exp(0.5 * logvar)
    return x_t, mu, logvar


if __name__ == "__main__":
    # A stack of T emitter steps (macro-batch): rows = T*B = 512 -> ONE grid step.
    T, B, z_dim, hid_dim, input_dim = 64, 8, 16, 32, 16

    key = jax.random.PRNGKey(0)
    k_params, k_z, k_eps = jax.random.split(key, 3)

    params = init_params(k_params, z_dim, hid_dim, input_dim)
    z_seq = jax.random.normal(k_z, (T, B, z_dim), jnp.float32)
    # deterministic stand-in for torch.randn(z_t.size(0), input_dim) at every step
    eps = jax.random.normal(k_eps, (T, B, input_dim), jnp.float32)

    fwd = jax.jit(functools.partial(emitter_forward, tile_r=2048))
    x_t, mu, logvar = fwd(z_seq, params, eps)
    jax.block_until_ready((x_t, mu, logvar))

    # correctness check against plain-JAX reference (same bf16 matmul operands)
    x_ref, mu_ref, lv_ref = reference_forward(z_seq, params, eps)
    assert x_t.shape == (T, B, input_dim) and mu.shape == (T, B, input_dim)
    assert jnp.allclose(mu, mu_ref, atol=1e-3, rtol=1e-3)
    assert jnp.allclose(x_t, x_ref, atol=1e-3, rtol=1e-3)
    assert jnp.allclose(logvar, lv_ref)

    print("KERNEL_OK")
</pallas_src>

<mosaic_0001>
module attributes {stable_mosaic.version = 11 : i64} {
  func.func @emitter_kernel(%arg0: i32, %arg1: memref<16x512xbf16, #tpu.memory_space<vmem>>, %arg2: memref<32x16xbf16, #tpu.memory_space<vmem>>, %arg3: memref<32x1xf32, #tpu.memory_space<vmem>>, %arg4: memref<32x32xbf16, #tpu.memory_space<vmem>>, %arg5: memref<32x1xf32, #tpu.memory_space<vmem>>, %arg6: memref<16x32xbf16, #tpu.memory_space<vmem>>, %arg7: memref<16x1xf32, #tpu.memory_space<vmem>>, %arg8: memref<16x1xf32, #tpu.memory_space<vmem>>, %arg9: memref<16x512xf32, #tpu.memory_space<vmem>>, %arg10: memref<32x512xf32, #tpu.memory_space<vmem>>) attributes {dimension_semantics = [#tpu.dimension_semantics<parallel>], iteration_bounds = array<i64: 1>, scalar_prefetch = 0 : i64, scratch_operands = 0 : i64, tpu.core_type = #tpu.core_type<tc>, window_params = [{transform_indices = @transform_0, window_bounds = array<i64: 16, 512>}, {pipeline_mode = #tpu.pipeline_mode<synchronous>, transform_indices = @transform_1, window_bounds = array<i64: 32, 16>}, {pipeline_mode = #tpu.pipeline_mode<synchronous>, transform_indices = @transform_2, window_bounds = array<i64: 32, 1>}, {pipeline_mode = #tpu.pipeline_mode<synchronous>, transform_indices = @transform_3, window_bounds = array<i64: 32, 32>}, {pipeline_mode = #tpu.pipeline_mode<synchronous>, transform_indices = @transform_4, window_bounds = array<i64: 32, 1>}, {pipeline_mode = #tpu.pipeline_mode<synchronous>, transform_indices = @transform_5, window_bounds = array<i64: 16, 32>}, {pipeline_mode = #tpu.pipeline_mode<synchronous>, transform_indices = @transform_6, window_bounds = array<i64: 16, 1>}, {pipeline_mode = #tpu.pipeline_mode<synchronous>, transform_indices = @transform_7, window_bounds = array<i64: 16, 1>}, {transform_indices = @transform_8, window_bounds = array<i64: 16, 512>}, {transform_indices = @transform_9, window_bounds = array<i64: 32, 512>}]} {
    %c0 = arith.constant 0 : index
    %c0_0 = arith.constant 0 : index
    %0 = vector.load %arg2[%c0, %c0_0] : memref<32x16xbf16, #tpu.memory_space<vmem>>, vector<32x16xbf16>
    %c0_1 = arith.constant 0 : index
    %c0_2 = arith.constant 0 : index
    %1 = vector.load %arg1[%c0_1, %c0_2] : memref<16x512xbf16, #tpu.memory_space<vmem>>, vector<16x512xbf16>
    %cst = arith.constant dense<0.000000e+00> : vector<32x512xf32>
    %2 = tpu.matmul %0, %1, %cst {dimension_numbers = #tpu.dot_dimension_numbers<[1], [0], [0], [1], [0, 0, 1, 1], [], []>} : vector<32x16xbf16>, vector<16x512xbf16>, vector<32x512xf32> -> vector<32x512xf32>
    %c0_3 = arith.constant 0 : index
    %c0_4 = arith.constant 0 : index
    %3 = vector.load %arg3[%c0_3, %c0_4] : memref<32x1xf32, #tpu.memory_space<vmem>>, vector<32x1xf32>
    %4 = vector.broadcast %3 : vector<32x1xf32> to vector<32x512xf32>
    %5 = arith.addf %2, %4 : vector<32x512xf32>
    %cst_5 = arith.constant 0.000000e+00 : f32
    %6 = vector.broadcast %cst_5 : f32 to vector<32x512xf32>
    %7 = arith.maximumf %5, %6 : vector<32x512xf32>
    %c0_6 = arith.constant 0 : index
    %c0_7 = arith.constant 0 : index
    %8 = vector.load %arg4[%c0_6, %c0_7] : memref<32x32xbf16, #tpu.memory_space<vmem>>, vector<32x32xbf16>
    %9 = arith.truncf %7 : vector<32x512xf32> to vector<32x512xbf16>
    %cst_8 = arith.constant dense<0.000000e+00> : vector<32x512xf32>
    %10 = tpu.matmul %8, %9, %cst_8 {dimension_numbers = #tpu.dot_dimension_numbers<[1], [0], [0], [1], [0, 0, 1, 1], [], []>} : vector<32x32xbf16>, vector<32x512xbf16>, vector<32x512xf32> -> vector<32x512xf32>
    %c0_9 = arith.constant 0 : index
    %c0_10 = arith.constant 0 : index
    %11 = vector.load %arg5[%c0_9, %c0_10] : memref<32x1xf32, #tpu.memory_space<vmem>>, vector<32x1xf32>
    %12 = vector.broadcast %11 : vector<32x1xf32> to vector<32x512xf32>
    %13 = arith.addf %10, %12 : vector<32x512xf32>
    %cst_11 = arith.constant 0.000000e+00 : f32
    %14 = vector.broadcast %cst_11 : f32 to vector<32x512xf32>
    %15 = arith.maximumf %13, %14 : vector<32x512xf32>
    %c0_12 = arith.constant 0 : index
    %c0_13 = arith.constant 0 : index
    %16 = vector.load %arg6[%c0_12, %c0_13] : memref<16x32xbf16, #tpu.memory_space<vmem>>, vector<16x32xbf16>
    %17 = arith.truncf %15 : vector<32x512xf32> to vector<32x512xbf16>
    %cst_14 = arith.constant dense<0.000000e+00> : vector<16x512xf32>
    %18 = tpu.matmul %16, %17, %cst_14 {dimension_numbers = #tpu.dot_dimension_numbers<[1], [0], [0], [1], [0, 0, 1, 1], [], []>} : vector<16x32xbf16>, vector<32x512xbf16>, vector<16x512xf32> -> vector<16x512xf32>
    %c0_15 = arith.constant 0 : index
    %c0_16 = arith.constant 0 : index
    %19 = vector.load %arg7[%c0_15, %c0_16] : memref<16x1xf32, #tpu.memory_space<vmem>>, vector<16x1xf32>
    %20 = vector.broadcast %19 : vector<16x1xf32> to vector<16x512xf32>
    %21 = arith.addf %18, %20 : vector<16x512xf32>
    %c0_17 = arith.constant 0 : index
    %c0_18 = arith.constant 0 : index
    %22 = vector.load %arg9[%c0_17, %c0_18] : memref<16x512xf32, #tpu.memory_space<vmem>>, vector<16x512xf32>
    %c0_19 = arith.constant 0 : index
    %c0_20 = arith.constant 0 : index
    %23 = vector.load %arg8[%c0_19, %c0_20] : memref<16x1xf32, #tpu.memory_space<vmem>>, vector<16x1xf32>
    %24 = vector.broadcast %23 : vector<16x1xf32> to vector<16x512xf32>
    %25 = arith.mulf %22, %24 : vector<16x512xf32>
    %26 = arith.addf %21, %25 : vector<16x512xf32>
    %27 = tpu.concatenate %26, %21 in 0 : vector<16x512xf32>, vector<16x512xf32> -> vector<32x512xf32>
    %c0_21 = arith.constant 0 : index
    %c0_22 = arith.constant 0 : index
    %28 = vector.load %arg10[%c0_21, %c0_22] : memref<32x512xf32, #tpu.memory_space<vmem>>, vector<32x512xf32>
    tpu.vector_store %arg10[%c0_21, %c0_22], %27 {strides = array<i32>} : memref<32x512xf32, #tpu.memory_space<vmem>>, vector<32x512xf32>,
    return
  }
  func.func @transform_0(%arg0: i32) -> (i32, i32) {
    %c0_i32 = arith.constant 0 : i32
    %c0_i32_0 = arith.constant 0 : i32
    return %c0_i32, %arg0 : i32, i32
  }
  func.func @transform_1(%arg0: i32) -> (i32, i32) {
    %c0_i32 = arith.constant 0 : i32
    %c0_i32_0 = arith.constant 0 : i32
    %c0_i32_1 = arith.constant 0 : i32
    return %c0_i32, %c0_i32_0 : i32, i32
  }
  func.func @transform_2(%arg0: i32) -> (i32, i32) {
    %c0_i32 = arith.constant 0 : i32
    %c0_i32_0 = arith.constant 0 : i32
    %c0_i32_1 = arith.constant 0 : i32
    return %c0_i32, %c0_i32_0 : i32, i32
  }
  func.func @transform_3(%arg0: i32) -> (i32, i32) {
    %c0_i32 = arith.constant 0 : i32
    %c0_i32_0 = arith.constant 0 : i32
    %c0_i32_1 = arith.constant 0 : i32
    return %c0_i32, %c0_i32_0 : i32, i32
  }
  func.func @transform_4(%arg0: i32) -> (i32, i32) {
    %c0_i32 = arith.constant 0 : i32
    %c0_i32_0 = arith.constant 0 : i32
    %c0_i32_1 = arith.constant 0 : i32
    return %c0_i32, %c0_i32_0 : i32, i32
  }
  func.func @transform_5(%arg0: i32) -> (i32, i32) {
    %c0_i32 = arith.constant 0 : i32
    %c0_i32_0 = arith.constant 0 : i32
    %c0_i32_1 = arith.constant 0 : i32
    return %c0_i32, %c0_i32_0 : i32, i32
  }
  func.func @transform_6(%arg0: i32) -> (i32, i32) {
    %c0_i32 = arith.constant 0 : i32
    %c0_i32_0 = arith.constant 0 : i32
    %c0_i32_1 = arith.constant 0 : i32
    return %c0_i32, %c0_i32_0 : i32, i32
  }
  func.func @transform_7(%arg0: i32) -> (i32, i32) {
    %c0_i32 = arith.constant 0 : i32
    %c0_i32_0 = arith.constant 0 : i32
    %c0_i32_1 = arith.constant 0 : i32
    return %c0_i32, %c0_i32_0 : i32, i32
  }
  func.func @transform_8(%arg0: i32) -> (i32, i32) {
    %c0_i32 = arith.constant 0 : i32
    %c0_i32_0 = arith.constant 0 : i32
    return %c0_i32, %arg0 : i32, i32
  }
  func.func @transform_9(%arg0: i32) -> (i32, i32) {
    %c0_i32 = arith.constant 0 : i32
    %c0_i32_0 = arith.constant 0 : i32
    return %c0_i32, %arg0 : i32, i32
  }
}

</mosaic_0001>

<llo_original>
// kernel: emitter_forward.1
$region0: #{emitter_forward.1}
  #allocation0 [shape = 'u32[]', space=smem, size = 0x4, offset = 0x4, fixed_abs, tag = 'smem constant byte address 0x4 - core index']
  #allocation1 [shape = 'u32[72,128]{1,0:T(1,128)}', space=vmem, size = 0x9000, scoped, tag = 'internal scratch']
  %s0 = inlined_call_operand.vmem [shape: bf16[16,512], index: 0, kind: input, shape index: {}]
  %s1 = inlined_call_operand.vmem [shape: bf16[32,16], index: 1, kind: input, shape index: {}]
  %s2 = inlined_call_operand.vmem [shape: f32[32,1], index: 2, kind: input, shape index: {}]
  %s3 = inlined_call_operand.vmem [shape: bf16[32,32], index: 3, kind: input, shape index: {}]
  %s4 = inlined_call_operand.vmem [shape: f32[32,1], index: 4, kind: input, shape index: {}]
  %s5 = inlined_call_operand.vmem [shape: bf16[16,32], index: 5, kind: input, shape index: {}]
  %s6 = inlined_call_operand.vmem [shape: f32[16,1], index: 6, kind: input, shape index: {}]
  %s7 = inlined_call_operand.vmem [shape: f32[16,1], index: 7, kind: input, shape index: {}]
  %s8 = inlined_call_operand.vmem [shape: f32[16,512], index: 8, kind: input, shape index: {}]
  %s9 = inlined_call_operand.vmem [shape: f32[32,512], index: 9, kind: output, shape index: {}]
  %s10 = sld [smem:[#allocation0]]
  $region46: #{emitter_forward.1} parent=0
    _
  %s12 = ssub.s32 1, %s10
  %s13 = scalar_select 0, %s12, %s10
  // Predicated region
  $region2: #{emitter_forward.1} parent=0 // pred_check
    _
  $region3: #{emitter_forward.1} parent=0 // pred_check_branch
    %15 = sbr.rel (0) target = $region5
  $region4: #{emitter_forward.1} parent=0 // pred_region
    _
  $region5: #{emitter_forward.1} parent=0 // pred_fallthru
    _
  // Predicated region
  $region6: #{emitter_forward.1} parent=0 // pred_check
    _
  $region7: #{emitter_forward.1} parent=0 // pred_check_branch
    %17 = sbr.rel (0) target = $region9
  $region8: #{emitter_forward.1} parent=0 // pred_region
    _
  $region9: #{emitter_forward.1} parent=0 // pred_fallthru
    _
  // Predicated region
  $region10: #{emitter_forward.1} parent=0 // pred_check
    _
  $region11: #{emitter_forward.1} parent=0 // pred_check_branch
    %19 = sbr.rel (0) target = $region13
  $region12: #{emitter_forward.1} parent=0 // pred_region
    _
  $region13: #{emitter_forward.1} parent=0 // pred_fallthru
    _
  // Predicated region
  $region14: #{emitter_forward.1} parent=0 // pred_check
    _
  $region15: #{emitter_forward.1} parent=0 // pred_check_branch
    %21 = sbr.rel (0) target = $region17
  $region16: #{emitter_forward.1} parent=0 // pred_region
    _
  $region17: #{emitter_forward.1} parent=0 // pred_fallthru
    _
  // Predicated region
  $region18: #{emitter_forward.1} parent=0 // pred_check
    _
  $region19: #{emitter_forward.1} parent=0 // pred_check_branch
    %23 = sbr.rel (0) target = $region21
  $region20: #{emitter_forward.1} parent=0 // pred_region
    _
  $region21: #{emitter_forward.1} parent=0 // pred_fallthru
    _
  // Predicated region
  $region22: #{emitter_forward.1} parent=0 // pred_check
    _
  $region23: #{emitter_forward.1} parent=0 // pred_check_branch
    %25 = sbr.rel (0) target = $region25
  $region24: #{emitter_forward.1} parent=0 // pred_region
    _
  $region25: #{emitter_forward.1} parent=0 // pred_fallthru
    _
  // Predicated region
  $region26: #{emitter_forward.1} parent=0 // pred_check
    _
  $region27: #{emitter_forward.1} parent=0 // pred_check_branch
    %27 = sbr.rel (0) target = $region29
  $region28: #{emitter_forward.1} parent=0 // pred_region
    _
  $region29: #{emitter_forward.1} parent=0 // pred_fallthru
    _
  // Predicated region
  $region30: #{emitter_forward.1} parent=0 // pred_check
    _
  $region31: #{emitter_forward.1} parent=0 // pred_check_branch
    %29 = sbr.rel (0) target = $region33
  $region32: #{emitter_forward.1} parent=0 // pred_region
    _
  $region33: #{emitter_forward.1} parent=0 // pred_fallthru
    _
  // Predicated region
  $region34: #{emitter_forward.1} parent=0 // pred_check
    _
  $region35: #{emitter_forward.1} parent=0 // pred_check_branch
    %31 = sbr.rel (0) target = $region37
  $region36: #{emitter_forward.1} parent=0 // pred_region
    _
  $region37: #{emitter_forward.1} parent=0 // pred_fallthru
    _
  %v33 = vld [vmem:[%s1] sm:$0xf]
  %v34 = vld [vmem:[%s1 + $0x4] sm:$0xf]
  %v35 = vld [vmem:[%s1 + $0x8] sm:$0xf]
  %v36 = vld [vmem:[%s1 + $0xc] sm:$0xf]
  %v37 = vld [vmem:[%s0] sm:$0xff]
  %v38 = vld [vmem:[%s0 + $0x8] sm:$0xff]
  %v39 = vld [vmem:[%s0 + $0x10] sm:$0xff]
  %v40 = vld [vmem:[%s0 + $0x18] sm:$0xff]
  %v41 = vld [vmem:[%s2] sm:$0xff]
  %v42 = vld [vmem:[%s2 + $0x8] sm:$0xff]
  %v43 = vld [vmem:[%s2 + $0x10] sm:$0xff]
  %v44 = vld [vmem:[%s2 + $0x18] sm:$0xff]
  %46 = vset.pattern.permute.xlu0 0
  %47 = vperm.xlu0 %46, %v41
  %v48 = vpop.permute.xlu0 %47
  %51 = vset.pattern.permute.xlu0 0
  %52 = vperm.xlu0 %51, %v42
  %v53 = vpop.permute.xlu0 %52
  %56 = vset.pattern.permute.xlu0 0
  %57 = vperm.xlu0 %56, %v43
  %v58 = vpop.permute.xlu0 %57
  %61 = vset.pattern.permute.xlu0 0
  %62 = vperm.xlu0 %61, %v44
  %v63 = vpop.permute.xlu0 %62
  %v69 = vunpack.c.l.b16 %v33
  %v70 = vunpack.c.l.b16 %v34
  %v71 = vunpack.c.l.b16 %v35
  %v72 = vunpack.c.l.b16 %v36
  %v73 = vpack.c.b16 %v70, %v69
  %v74 = vpack.c.b16 %v72, %v71
  %v79 = vunpack.c.l.b16 %v37
  %v80 = vunpack.c.h.b16 %v37
  %v81 = vunpack.c.l.b16 %v38
  %v82 = vunpack.c.h.b16 %v38
  %v83 = vunpack.c.l.b16 %v39
  %v84 = vunpack.c.h.b16 %v39
  %v85 = vunpack.c.l.b16 %v40
  %v86 = vunpack.c.h.b16 %v40
  %v87 = vpack.c.b16 %v83, %v79
  %v88 = vpack.c.b16 %v84, %v80
  %v89 = vpack.c.b16 %v85, %v81
  %v90 = vpack.c.b16 %v86, %v82
  %vm95 = vcmask 130048
  %v97 = vsel %vm95, %v73, 0
  %v100 = vsel %vm95, %v74, 0
  %102 = vmatpush.bf16.msra.mxu0 0
  %103 = vmatpush.bf16.msra.mxu0 0
  %104 = vmatpush.bf16.msra.mxu0 0
  %105 = vmatpush.bf16.msra.mxu0 0
  %106 = vmatpush.bf16.msra.mxu0 0
  %107 = vmatpush.bf16.msra.mxu0 0
  %108 = vmatpush.bf16.msra.mxu0 0
  %109 = vmatpush.bf16.msra.mxu0 %v87
  %110 = vmatmul.bf16.gmra.mxu0 %v97
  %v111 = vpop.f32.mrf.mxu0
  %v112 = vadd.f32 %v48, %v111
  %v113 = vpop.f32.mrf.mxu0
  %v114 = vadd.f32 %v53, %v113
  %115 = vmatmul.bf16.gmra.mxu0 %v100
  %v116 = vpop.f32.mrf.mxu0
  %v117 = vadd.f32 %v58, %v116
  %v118 = vpop.f32.mrf.mxu0
  %v119 = vadd.f32 %v63, %v118
  %120 = vdwg.mxu0
  %121 = vmatpush.bf16.msra.mxu0 0
  %122 = vmatpush.bf16.msra.mxu0 0
  %123 = vmatpush.bf16.msra.mxu0 0
  %124 = vmatpush.bf16.msra.mxu0 0
  %125 = vmatpush.bf16.msra.mxu0 0
  %126 = vmatpush.bf16.msra.mxu0 0
  %127 = vmatpush.bf16.msra.mxu0 0
  %128 = vmatpush.bf16.msra.mxu0 %v88
  %129 = vmatmul.bf16.gmra.mxu0 %v97
  %v130 = vpop.f32.mrf.mxu0
  %v131 = vadd.f32 %v48, %v130
  %v132 = vpop.f32.mrf.mxu0
  %v133 = vadd.f32 %v53, %v132
  %134 = vmatmul.bf16.gmra.mxu0 %v100
  %v135 = vpop.f32.mrf.mxu0
  %v136 = vadd.f32 %v58, %v135
  %v137 = vpop.f32.mrf.mxu0
  %v138 = vadd.f32 %v63, %v137
  %139 = vdwg.mxu0
  %140 = vmatpush.bf16.msra.mxu0 0
  %141 = vmatpush.bf16.msra.mxu0 0
  %142 = vmatpush.bf16.msra.mxu0 0
  %143 = vmatpush.bf16.msra.mxu0 0
  %144 = vmatpush.bf16.msra.mxu0 0
  %145 = vmatpush.bf16.msra.mxu0 0
  %146 = vmatpush.bf16.msra.mxu0 0
  %147 = vmatpush.bf16.msra.mxu0 %v89
  %148 = vmatmul.bf16.gmra.mxu0 %v97
  %v149 = vpop.f32.mrf.mxu0
  %v150 = vadd.f32 %v48, %v149
  %v151 = vpop.f32.mrf.mxu0
  %v152 = vadd.f32 %v53, %v151
  %153 = vmatmul.bf16.gmra.mxu0 %v100
  %v154 = vpop.f32.mrf.mxu0
  %v155 = vadd.f32 %v58, %v154
  %v156 = vpop.f32.mrf.mxu0
  %v157 = vadd.f32 %v63, %v156
  %158 = vdwg.mxu0
  %159 = vmatpush.bf16.msra.mxu0 0
  %160 = vmatpush.bf16.msra.mxu0 0
  %161 = vmatpush.bf16.msra.mxu0 0
  %162 = vmatpush.bf16.msra.mxu0 0
  %163 = vmatpush.bf16.msra.mxu0 0
  %164 = vmatpush.bf16.msra.mxu0 0
  %165 = vmatpush.bf16.msra.mxu0 0
  %166 = vmatpush.bf16.msra.mxu0 %v90
  %167 = vmatmul.bf16.gmra.mxu0 %v97
  %v168 = vpop.f32.mrf.mxu0
  %v169 = vadd.f32 %v48, %v168
  %v170 = vpop.f32.mrf.mxu0
  %v171 = vadd.f32 %v53, %v170
  %172 = vmatmul.bf16.gmra.mxu0 %v100
  %v173 = vpop.f32.mrf.mxu0
  %v174 = vadd.f32 %v58, %v173
  %v175 = vpop.f32.mrf.mxu0
  %v176 = vadd.f32 %v63, %v175
  %177 = vdwg.mxu0
  %v178 = vmax.f32 %v112, 0.0
  %v179 = vmax.f32 %v131, 0.0
  %v180 = vmax.f32 %v150, 0.0
  %v181 = vmax.f32 %v169, 0.0
  %v182 = vmax.f32 %v114, 0.0
  %v183 = vmax.f32 %v133, 0.0
  %v184 = vmax.f32 %v152, 0.0
  %v185 = vmax.f32 %v171, 0.0
  %v186 = vmax.f32 %v117, 0.0
  %v187 = vmax.f32 %v136, 0.0
  %v188 = vmax.f32 %v155, 0.0
  %v189 = vmax.f32 %v174, 0.0
  %v190 = vmax.f32 %v119, 0.0
  %v191 = vmax.f32 %v138, 0.0
  %v192 = vmax.f32 %v157, 0.0
  %v193 = vmax.f32 %v176, 0.0
  %v194 = vld [vmem:[%s3] sm:$0xf]
  %v195 = vld [vmem:[%s3 + $0x4] sm:$0xf]
  %v196 = vld [vmem:[%s3 + $0x8] sm:$0xf]
  %v197 = vld [vmem:[%s3 + $0xc] sm:$0xf]
  %v198 = vpack.c.bf16 %v182, %v178
  %v199 = vpack.c.bf16 %v183, %v179
  %v200 = vpack.c.bf16 %v184, %v180
  %v201 = vpack.c.bf16 %v185, %v181
  %v202 = vpack.c.bf16 %v190, %v186
  %v203 = vpack.c.bf16 %v191, %v187
  %v204 = vpack.c.bf16 %v192, %v188
  %v205 = vpack.c.bf16 %v193, %v189
  %v206 = vld [vmem:[%s4] sm:$0xff]
  %v207 = vld [vmem:[%s4 + $0x8] sm:$0xff]
  %v208 = vld [vmem:[%s4 + $0x10] sm:$0xff]
  %v209 = vld [vmem:[%s4 + $0x18] sm:$0xff]
  %211 = vset.pattern.permute.xlu0 0
  %212 = vperm.xlu0 %211, %v206
  %v213 = vpop.permute.xlu0 %212
  %216 = vset.pattern.permute.xlu0 0
  %217 = vperm.xlu0 %216, %v207
  %v218 = vpop.permute.xlu0 %217
  %221 = vset.pattern.permute.xlu0 0
  %222 = vperm.xlu0 %221, %v208
  %v223 = vpop.permute.xlu0 %222
  %226 = vset.pattern.permute.xlu0 0
  %227 = vperm.xlu0 %226, %v209
  %v228 = vpop.permute.xlu0 %227
  %v234 = vunpack.c.l.b16 %v194
  %v235 = vunpack.c.l.b16 %v195
  %v236 = vunpack.c.l.b16 %v196
  %v237 = vunpack.c.l.b16 %v197
  %v238 = vpack.c.b16 %v235, %v234
  %v239 = vpack.c.b16 %v237, %v236
  %vm240 = vcmask 261120
  %v242 = vsel %vm240, %v238, 0
  %v245 = vsel %vm240, %v239, 0
  %247 = vmatpush.bf16.msra.mxu0 0
  %248 = vmatpush.bf16.msra.mxu0 0
  %249 = vmatpush.bf16.msra.mxu0 0
  %250 = vmatpush.bf16.msra.mxu0 0
  %251 = vmatpush.bf16.msra.mxu0 0
  %252 = vmatpush.bf16.msra.mxu0 0
  %253 = vmatpush.bf16.msra.mxu0 %v202
  %254 = vmatpush.bf16.msra.mxu0 %v198
  %255 = vmatmul.bf16.gmra.mxu0 %v242
  %v256 = vpop.f32.mrf.mxu0
  %v257 = vadd.f32 %v213, %v256
  %v258 = vpop.f32.mrf.mxu0
  %v259 = vadd.f32 %v218, %v258
  %260 = vmatmul.bf16.gmra.mxu0 %v245
  %v261 = vpop.f32.mrf.mxu0
  %v262 = vadd.f32 %v223, %v261
  %v263 = vpop.f32.mrf.mxu0
  %v264 = vadd.f32 %v228, %v263
  %265 = vdwg.mxu0
  %266 = vmatpush.bf16.msra.mxu0 0
  %267 = vmatpush.bf16.msra.mxu0 0
  %268 = vmatpush.bf16.msra.mxu0 0
  %269 = vmatpush.bf16.msra.mxu0 0
  %270 = vmatpush.bf16.msra.mxu0 0
  %271 = vmatpush.bf16.msra.mxu0 0
  %272 = vmatpush.bf16.msra.mxu0 %v203
  %273 = vmatpush.bf16.msra.mxu0 %v199
  %274 = vmatmul.bf16.gmra.mxu0 %v242
  %v275 = vpop.f32.mrf.mxu0
  %v276 = vadd.f32 %v213, %v275
  %v277 = vpop.f32.mrf.mxu0
  %v278 = vadd.f32 %v218, %v277
  %279 = vmatmul.bf16.gmra.mxu0 %v245
  %v280 = vpop.f32.mrf.mxu0
  %v281 = vadd.f32 %v223, %v280
  %v282 = vpop.f32.mrf.mxu0
  %v283 = vadd.f32 %v228, %v282
  %284 = vdwg.mxu0
  %285 = vmatpush.bf16.msra.mxu0 0
  %286 = vmatpush.bf16.msra.mxu0 0
  %287 = vmatpush.bf16.msra.mxu0 0
  %288 = vmatpush.bf16.msra.mxu0 0
  %289 = vmatpush.bf16.msra.mxu0 0
  %290 = vmatpush.bf16.msra.mxu0 0
  %291 = vmatpush.bf16.msra.mxu0 %v204
  %292 = vmatpush.bf16.msra.mxu0 %v200
  %293 = vmatmul.bf16.gmra.mxu0 %v242
  %v294 = vpop.f32.mrf.mxu0
  %v295 = vadd.f32 %v213, %v294
  %v296 = vpop.f32.mrf.mxu0
  %v297 = vadd.f32 %v218, %v296
  %298 = vmatmul.bf16.gmra.mxu0 %v245
  %v299 = vpop.f32.mrf.mxu0
  %v300 = vadd.f32 %v223, %v299
  %v301 = vpop.f32.mrf.mxu0
  %v302 = vadd.f32 %v228, %v301
  %303 = vdwg.mxu0
  %304 = vmatpush.bf16.msra.mxu0 0
  %305 = vmatpush.bf16.msra.mxu0 0
  %306 = vmatpush.bf16.msra.mxu0 0
  %307 = vmatpush.bf16.msra.mxu0 0
  %308 = vmatpush.bf16.msra.mxu0 0
  %309 = vmatpush.bf16.msra.mxu0 0
  %310 = vmatpush.bf16.msra.mxu0 %v205
  %311 = vmatpush.bf16.msra.mxu0 %v201
  %312 = vmatmul.bf16.gmra.mxu0 %v242
  %v313 = vpop.f32.mrf.mxu0
  %v314 = vadd.f32 %v213, %v313
  %v315 = vpop.f32.mrf.mxu0
  %v316 = vadd.f32 %v218, %v315
  %317 = vmatmul.bf16.gmra.mxu0 %v245
  %v318 = vpop.f32.mrf.mxu0
  %v319 = vadd.f32 %v223, %v318
  %v320 = vpop.f32.mrf.mxu0
  %v321 = vadd.f32 %v228, %v320
  %322 = vdwg.mxu0
  %v323 = vmax.f32 %v257, 0.0
  %v324 = vmax.f32 %v276, 0.0
  %v325 = vmax.f32 %v295, 0.0
  %v326 = vmax.f32 %v314, 0.0
  %v327 = vmax.f32 %v259, 0.0
  %v328 = vmax.f32 %v278, 0.0
  %v329 = vmax.f32 %v297, 0.0
  %v330 = vmax.f32 %v316, 0.0
  %v331 = vmax.f32 %v262, 0.0
  %v332 = vmax.f32 %v281, 0.0
  %v333 = vmax.f32 %v300, 0.0
  %v334 = vmax.f32 %v319, 0.0
  %v335 = vmax.f32 %v264, 0.0
  %v336 = vmax.f32 %v283, 0.0
  %v337 = vmax.f32 %v302, 0.0
  %v338 = vmax.f32 %v321, 0.0
  %v339 = vld [vmem:[%s5] sm:$0xf]
  %v340 = vld [vmem:[%s5 + $0x4] sm:$0xf]
  %v341 = vpack.c.bf16 %v327, %v323
  %v342 = vpack.c.bf16 %v328, %v324
  %v343 = vpack.c.bf16 %v329, %v325
  %v344 = vpack.c.bf16 %v330, %v326
  %v345 = vpack.c.bf16 %v335, %v331
  %v346 = vpack.c.bf16 %v336, %v332
  %v347 = vpack.c.bf16 %v337, %v333
  %v348 = vpack.c.bf16 %v338, %v334
  %v349 = vld [vmem:[%s6] sm:$0xff]
  %v350 = vld [vmem:[%s6 + $0x8] sm:$0xff]
  %352 = vset.pattern.permute.xlu0 0
  %353 = vperm.xlu0 %352, %v349
  %v354 = vpop.permute.xlu0 %353
  %357 = vset.pattern.permute.xlu0 0
  %358 = vperm.xlu0 %357, %v350
  %v359 = vpop.permute.xlu0 %358
  %v363 = vunpack.c.l.b16 %v339
  %v364 = vunpack.c.l.b16 %v340
  %v365 = vpack.c.b16 %v364, %v363
  %v367 = vsel %vm240, %v365, 0
  %369 = vmatpush.bf16.msra.mxu0 0
  %370 = vmatpush.bf16.msra.mxu0 0
  %371 = vmatpush.bf16.msra.mxu0 0
  %372 = vmatpush.bf16.msra.mxu0 0
  %373 = vmatpush.bf16.msra.mxu0 0
  %374 = vmatpush.bf16.msra.mxu0 0
  %375 = vmatpush.bf16.msra.mxu0 %v345
  %376 = vmatpush.bf16.msra.mxu0 %v341
  %377 = vmatmul.bf16.gmra.mxu0 %v367
  %v378 = vpop.f32.mrf.mxu0
  %v379 = vadd.f32 %v354, %v378
  %v380 = vpop.f32.mrf.mxu0
  %v381 = vadd.f32 %v359, %v380
  %382 = vdwg.mxu0
  %383 = vmatpush.bf16.msra.mxu0 0
  %384 = vmatpush.bf16.msra.mxu0 0
  %385 = vmatpush.bf16.msra.mxu0 0
  %386 = vmatpush.bf16.msra.mxu0 0
  %387 = vmatpush.bf16.msra.mxu0 0
  %388 = vmatpush.bf16.msra.mxu0 0
  %389 = vmatpush.bf16.msra.mxu0 %v346
  %390 = vmatpush.bf16.msra.mxu0 %v342
  %391 = vmatmul.bf16.gmra.mxu0 %v367
  %v392 = vpop.f32.mrf.mxu0
  %v393 = vadd.f32 %v354, %v392
  %v394 = vpop.f32.mrf.mxu0
  %v395 = vadd.f32 %v359, %v394
  %396 = vdwg.mxu0
  %397 = vmatpush.bf16.msra.mxu0 0
  %398 = vmatpush.bf16.msra.mxu0 0
  %399 = vmatpush.bf16.msra.mxu0 0
  %400 = vmatpush.bf16.msra.mxu0 0
  %401 = vmatpush.bf16.msra.mxu0 0
  %402 = vmatpush.bf16.msra.mxu0 0
  %403 = vmatpush.bf16.msra.mxu0 %v347
  %404 = vmatpush.bf16.msra.mxu0 %v343
  %405 = vmatmul.bf16.gmra.mxu0 %v367
  %v406 = vpop.f32.mrf.mxu0
  %v407 = vadd.f32 %v354, %v406
  %v408 = vpop.f32.mrf.mxu0
  %v409 = vadd.f32 %v359, %v408
  %410 = vdwg.mxu0
  %411 = vmatpush.bf16.msra.mxu0 0
  %412 = vmatpush.bf16.msra.mxu0 0
  %413 = vmatpush.bf16.msra.mxu0 0
  %414 = vmatpush.bf16.msra.mxu0 0
  %415 = vmatpush.bf16.msra.mxu0 0
  %416 = vmatpush.bf16.msra.mxu0 0
  %417 = vmatpush.bf16.msra.mxu0 %v348
  %418 = vmatpush.bf16.msra.mxu0 %v344
  %419 = vmatmul.bf16.gmra.mxu0 %v367
  %v420 = vpop.f32.mrf.mxu0
  %v421 = vadd.f32 %v354, %v420
  %v422 = vpop.f32.mrf.mxu0
  %v423 = vadd.f32 %v359, %v422
  %424 = vdwg.mxu0
  %v425 = vld [vmem:[%s8] sm:$0xff]
  %v426 = vld [vmem:[%s8 + $0x8] sm:$0xff]
  %v427 = vld [vmem:[%s8 + $0x10] sm:$0xff]
  %v428 = vld [vmem:[%s8 + $0x18] sm:$0xff]
  %v429 = vld [vmem:[%s8 + $0x20] sm:$0xff]
  %v430 = vld [vmem:[%s8 + $0x28] sm:$0xff]
  %v431 = vld [vmem:[%s8 + $0x30] sm:$0xff]
  %v432 = vld [vmem:[%s8 + $0x38] sm:$0xff]
  %v433 = vld [vmem:[%s7] sm:$0xff]
  %v434 = vld [vmem:[%s7 + $0x8] sm:$0xff]
  %436 = vset.pattern.permute.xlu0 0
  %437 = vperm.xlu0 %436, %v433
  %v438 = vpop.permute.xlu0 %437
  %441 = vset.pattern.permute.xlu0 0
  %442 = vperm.xlu0 %441, %v434
  %v443 = vpop.permute.xlu0 %442
  %v445 = vmul.f32 %v425, %v438
  %v446 = vmul.f32 %v426, %v438
  %v447 = vmul.f32 %v427, %v438
  %v448 = vmul.f32 %v428, %v438
  %v449 = vmul.f32 %v429, %v443
  %v450 = vmul.f32 %v430, %v443
  %v451 = vmul.f32 %v431, %v443
  %v452 = vmul.f32 %v432, %v443
  %v453 = vadd.f32 %v379, %v445
  %v454 = vadd.f32 %v393, %v446
  %v455 = vadd.f32 %v407, %v447
  %v456 = vadd.f32 %v421, %v448
  %v457 = vadd.f32 %v381, %v449
  %v458 = vadd.f32 %v395, %v450
  %v459 = vadd.f32 %v409, %v451
  %v460 = vadd.f32 %v423, %v452
  %461 = vst [vmem:[%s9] sm:$0xff] %v453
  %462 = vst [vmem:[%s9 + $0x8] sm:$0xff] %v454
  %463 = vst [vmem:[%s9 + $0x10] sm:$0xff] %v455
  %464 = vst [vmem:[%s9 + $0x18] sm:$0xff] %v456
  %465 = vst [vmem:[%s9 + $0x20] sm:$0xff] %v457
  %466 = vst [vmem:[%s9 + $0x28] sm:$0xff] %v458
  %467 = vst [vmem:[%s9 + $0x30] sm:$0xff] %v459
  %468 = vst [vmem:[%s9 + $0x38] sm:$0xff] %v460
  %469 = vst [vmem:[%s9 + $0x40] sm:$0xff] %v379
  %470 = vst [vmem:[%s9 + $0x48] sm:$0xff] %v393
  %471 = vst [vmem:[%s9 + $0x50] sm:$0xff] %v407
  %472 = vst [vmem:[%s9 + $0x58] sm:$0xff] %v421
  %473 = vst [vmem:[%s9 + $0x60] sm:$0xff] %v381
  %474 = vst [vmem:[%s9 + $0x68] sm:$0xff] %v395
  %475 = vst [vmem:[%s9 + $0x70] sm:$0xff] %v409
  %476 = vst [vmem:[%s9 + $0x78] sm:$0xff] %v423
  // Predicated region
  $region38: #{emitter_forward.1} parent=0 // pred_check
    _
  $region39: #{emitter_forward.1} parent=0 // pred_check_branch
    %478 = sbr.rel (0) target = $region41
  $region40: #{emitter_forward.1} parent=0 // pred_region
    _
  $region41: #{emitter_forward.1} parent=0 // pred_fallthru
    _
  // Predicated region
  $region42: #{emitter_forward.1} parent=0 // pred_check
    _
  $region43: #{emitter_forward.1} parent=0 // pred_check_branch
    %480 = sbr.rel (0) target = $region45
  $region44: #{emitter_forward.1} parent=0 // pred_region
    _
  $region45: #{emitter_forward.1} parent=0 // pred_fallthru
    _

</llo_original>
